<compile_context>
chip_gen: v5e
topology: v5e:2x2
jax: 0.10.0
libtpu: 0.0.40
codegen_flags: <defaults>
</compile_context>

<pallas_src>
import math

import jax
import jax.numpy as jnp
from jax.experimental import pallas as pl
from jax.experimental.pallas import tpu as pltpu


# ----------------------------------------------------------------------------
# in-kernel helpers
# ----------------------------------------------------------------------------
def _sigmoid(z):
    # Exact sigmoid expressed through tanh: routed to the EUP slot and free of
    # the transient inf that 1/(1+exp(-z)) produces for large negative z.
    return 0.5 * (jnp.tanh(0.5 * z) + 1.0)


def _bn_feat(x, gamma, beta, eps=1e-5):
    # BatchNorm1d on (B, F) in training mode: per-feature batch stats, biased var.
    mean = jnp.mean(x, axis=0, keepdims=True)
    d = x - mean
    var = jnp.mean(d * d, axis=0, keepdims=True)
    return d * jax.lax.rsqrt(var + eps) * gamma + beta


# ----------------------------------------------------------------------------
# the fused DAM kernel
# ----------------------------------------------------------------------------
def _dam_kernel(x_ref, w1_ref, b1_ref, g1_ref, be1_ref,
                w2_ref, b2_ref, g2_ref, be2_ref, sa_ref, out_ref):
    x = x_ref[...]                                          # (B, C, L) f32

    # ---- channel attention: GAP / GMP over length --------------------------
    gapx = jnp.mean(x, axis=2)                              # (B, C)
    gmpx = jnp.max(x, axis=2)                               # (B, C)

    w1 = w1_ref[...]
    w2 = w2_ref[...]

    def fcn(z):
        # Linear -> BN -> ReLU -> Linear -> BN -> Sigmoid (shared weights,
        # per-call batch statistics, exactly like the reference).
        h = jnp.dot(z, w1, preferred_element_type=jnp.float32) + b1_ref[...]
        h = jnp.maximum(_bn_feat(h, g1_ref[...], be1_ref[...]), 0.0)
        o = jnp.dot(h, w2, preferred_element_type=jnp.float32) + b2_ref[...]
        return _sigmoid(_bn_feat(o, g2_ref[...], be2_ref[...]))

    # Outer sigmoid on top of the per-branch sigmoids matches the reference.
    cattn = _sigmoid(fcn(gapx) + fcn(gmpx))                 # (B, C)

    # ---- spatial attention: avg / max over channels -------------------------
    capx = jnp.mean(x, axis=1, keepdims=True)               # (B, 1, L)
    cmpx = jnp.max(x, axis=1, keepdims=True)                # (B, 1, L)
    # convsa: Conv1d(2, 1, kernel_size=1) -> 2 scalar weights + 1 bias (SMEM).
    sattn = _sigmoid(sa_ref[0] * capx + sa_ref[1] * cmpx + sa_ref[2])

    # ---- apply both attentions in a single elementwise pass -----------------
    scale = cattn[:, :, None] * sattn                       # (B, C, L)
    out_ref[...] = (scale * x).astype(out_ref.dtype)


# ----------------------------------------------------------------------------
# wrapper
# ----------------------------------------------------------------------------
def dam_forward(x, p):
    B, C, L = x.shape
    vmem = pl.BlockSpec(memory_space=pltpu.MemorySpace.VMEM)
    smem = pl.BlockSpec(memory_space=pltpu.MemorySpace.SMEM)
    inputs = [x,
              p["w1t"], p["b1"], p["g1"], p["be1"],
              p["w2t"], p["b2"], p["g2"], p["be2"],
              p["sa"]]
    # Single-block call: all weights + activations are a few KiB, far below the
    # VMEM limit on every TPU generation.  A parallel L-grid would require a
    # two-pass reduction for the channel attention and, at these shapes, be
    # pure launch overhead.
    return pl.pallas_call(
        _dam_kernel,
        out_shape=jax.ShapeDtypeStruct((B, C, L), jnp.float32),
        in_specs=[vmem] * 9 + [smem],
        out_specs=vmem,
    )(*inputs)


# ----------------------------------------------------------------------------
# deterministic parameter init (PyTorch default inits; packing hoisted here so
# the per-forward trace does zero weight reshapes/transposes)
# ----------------------------------------------------------------------------
def _init_linear(key, out_f, in_f):
    k1, k2 = jax.random.split(key)
    bound = 1.0 / math.sqrt(in_f)
    w = jax.random.uniform(k1, (out_f, in_f), jnp.float32, -bound, bound)
    b = jax.random.uniform(k2, (out_f,), jnp.float32, -bound, bound)
    return w, b


def init_params(key, C):
    k1, k2, k3 = jax.random.split(key, 3)
    w1, b1 = _init_linear(k1, C, C)
    w2, b2 = _init_linear(k2, C, C)
    saw, sab = _init_linear(k3, 1, 2)           # Conv1d(2, 1, kernel_size=1)
    return dict(
        w1t=w1.T, b1=b1[None, :], g1=jnp.ones((1, C)), be1=jnp.zeros((1, C)),
        w2t=w2.T, b2=b2[None, :], g2=jnp.ones((1, C)), be2=jnp.zeros((1, C)),
        sa=jnp.array([saw[0, 0], saw[0, 1], sab[0]], jnp.float32),
    )


# pure-JAX reference (same math, no Pallas) for a sanity check
def dam_reference(x, p):
    gapx = jnp.mean(x, axis=2)
    gmpx = jnp.max(x, axis=2)

    def fcn(z):
        h = z @ p["w1t"] + p["b1"]
        h = jnp.maximum(_bn_feat(h, p["g1"], p["be1"]), 0.0)
        o = h @ p["w2t"] + p["b2"]
        return jax.nn.sigmoid(_bn_feat(o, p["g2"], p["be2"]))

    cattn = jax.nn.sigmoid(fcn(gapx) + fcn(gmpx))[:, :, None]
    capx = jnp.mean(x, axis=1, keepdims=True)
    cmpx = jnp.max(x, axis=1, keepdims=True)
    sattn = jax.nn.sigmoid(p["sa"][0] * capx + p["sa"][1] * cmpx + p["sa"][2])
    return sattn * (cattn * x)


if __name__ == "__main__":
    key = jax.random.PRNGKey(0)
    kx, kp = jax.random.split(key)
    B, C, L = 2, 16, 128                 # small; L=128 keeps stores lane-dense
    x = jax.random.normal(kx, (B, C, L), jnp.float32)
    params = init_params(kp, C)

    y = jax.block_until_ready(jax.jit(dam_forward)(x, params))
    assert y.shape == (B, C, L), y.shape
    assert bool(jnp.all(jnp.isfinite(y)))

    y_ref = dam_reference(x, params)
    assert bool(jnp.allclose(y, y_ref, atol=1e-3, rtol=1e-3)), \
        float(jnp.max(jnp.abs(y - y_ref)))
    print("KERNEL_OK")
</pallas_src>

<mosaic_0001>
module attributes {stable_mosaic.version = 11 : i64} {
  func.func @_dam_kernel(%arg0: memref<2x16x128xf32, #tpu.memory_space<vmem>>, %arg1: memref<16x16xf32, #tpu.memory_space<vmem>>, %arg2: memref<1x16xf32, #tpu.memory_space<vmem>>, %arg3: memref<1x16xf32, #tpu.memory_space<vmem>>, %arg4: memref<1x16xf32, #tpu.memory_space<vmem>>, %arg5: memref<16x16xf32, #tpu.memory_space<vmem>>, %arg6: memref<1x16xf32, #tpu.memory_space<vmem>>, %arg7: memref<1x16xf32, #tpu.memory_space<vmem>>, %arg8: memref<1x16xf32, #tpu.memory_space<vmem>>, %arg9: memref<3xf32, #tpu.memory_space<smem>>, %arg10: memref<2x16x128xf32, #tpu.memory_space<vmem>>) attributes {dimension_semantics = [], scalar_prefetch = 0 : i64, scratch_operands = 0 : i64, tpu.core_type = #tpu.core_type<tc>} {
    %c0 = arith.constant 0 : index
    %c0_0 = arith.constant 0 : index
    %c0_1 = arith.constant 0 : index
    %0 = vector.load %arg0[%c0, %c0_0, %c0_1] : memref<2x16x128xf32, #tpu.memory_space<vmem>>, vector<2x16x128xf32>
    %cst = arith.constant dense<0.000000e+00> : vector<2x16xf32>
    %1 = vector.multi_reduction <add>, %0, %cst [2] : vector<2x16x128xf32> to vector<2x16xf32>
    %cst_2 = arith.constant 1.280000e+02 : f32
    %2 = vector.broadcast %cst_2 : f32 to vector<2x16xf32>
    %3 = arith.divf %1, %2 : vector<2x16xf32>
    %cst_3 = arith.constant dense<0xFF800000> : vector<2x16xf32>
    %4 = vector.multi_reduction <maximumf>, %0, %cst_3 [2] : vector<2x16x128xf32> to vector<2x16xf32>
    %c0_4 = arith.constant 0 : index
    %c0_5 = arith.constant 0 : index
    %5 = vector.load %arg1[%c0_4, %c0_5] : memref<16x16xf32, #tpu.memory_space<vmem>>, vector<16x16xf32>
    %c0_6 = arith.constant 0 : index
    %c0_7 = arith.constant 0 : index
    %6 = vector.load %arg5[%c0_6, %c0_7] : memref<16x16xf32, #tpu.memory_space<vmem>>, vector<16x16xf32>
    %cst_8 = arith.constant dense<0.000000e+00> : vector<2x16xf32>
    %7 = tpu.matmul %3, %5, %cst_8 {dimension_numbers = #tpu.dot_dimension_numbers<[1], [0], [0], [1], [0, 0, 1, 1], [], []>} : vector<2x16xf32>, vector<16x16xf32>, vector<2x16xf32> -> vector<2x16xf32>
    %c0_9 = arith.constant 0 : index
    %c0_10 = arith.constant 0 : index
    %8 = vector.load %arg2[%c0_9, %c0_10] : memref<1x16xf32, #tpu.memory_space<vmem>>, vector<1x16xf32>
    %9 = vector.broadcast %8 : vector<1x16xf32> to vector<2x16xf32>
    %10 = arith.addf %7, %9 : vector<2x16xf32>
    %c0_11 = arith.constant 0 : index
    %c0_12 = arith.constant 0 : index
    %11 = vector.load %arg3[%c0_11, %c0_12] : memref<1x16xf32, #tpu.memory_space<vmem>>, vector<1x16xf32>
    %c0_13 = arith.constant 0 : index
    %c0_14 = arith.constant 0 : index
    %12 = vector.load %arg4[%c0_13, %c0_14] : memref<1x16xf32, #tpu.memory_space<vmem>>, vector<1x16xf32>
    %cst_15 = arith.constant dense<0.000000e+00> : vector<16xf32>
    %13 = vector.multi_reduction <add>, %10, %cst_15 [0] : vector<2x16xf32> to vector<16xf32>
    %14 = vector.shape_cast %13 : vector<16xf32> to vector<1x16xf32>
    %cst_16 = arith.constant 2.000000e+00 : f32
    %15 = vector.broadcast %cst_16 : f32 to vector<1x16xf32>
    %16 = arith.divf %14, %15 : vector<1x16xf32>
    %17 = vector.broadcast %16 : vector<1x16xf32> to vector<2x16xf32>
    %18 = arith.subf %10, %17 : vector<2x16xf32>
    %19 = arith.mulf %18, %18 : vector<2x16xf32>
    %cst_17 = arith.constant dense<0.000000e+00> : vector<16xf32>
    %20 = vector.multi_reduction <add>, %19, %cst_17 [0] : vector<2x16xf32> to vector<16xf32>
    %21 = vector.shape_cast %20 : vector<16xf32> to vector<1x16xf32>
    %cst_18 = arith.constant 2.000000e+00 : f32
    %22 = vector.broadcast %cst_18 : f32 to vector<1x16xf32>
    %23 = arith.divf %21, %22 : vector<1x16xf32>
    %cst_19 = arith.constant 9.99999974E-6 : f32
    %24 = vector.broadcast %cst_19 : f32 to vector<1x16xf32>
    %25 = arith.addf %23, %24 : vector<1x16xf32>
    %26 = math.rsqrt %25 : vector<1x16xf32>
    %27 = vector.broadcast %26 : vector<1x16xf32> to vector<2x16xf32>
    %28 = arith.mulf %18, %27 : vector<2x16xf32>
    %29 = vector.broadcast %11 : vector<1x16xf32> to vector<2x16xf32>
    %30 = arith.mulf %28, %29 : vector<2x16xf32>
    %31 = vector.broadcast %12 : vector<1x16xf32> to vector<2x16xf32>
    %32 = arith.addf %30, %31 : vector<2x16xf32>
    %cst_20 = arith.constant 0.000000e+00 : f32
    %33 = vector.broadcast %cst_20 : f32 to vector<2x16xf32>
    %34 = arith.maximumf %32, %33 : vector<2x16xf32>
    %cst_21 = arith.constant dense<0.000000e+00> : vector<2x16xf32>
    %35 = tpu.matmul %34, %6, %cst_21 {dimension_numbers = #tpu.dot_dimension_numbers<[1], [0], [0], [1], [0, 0, 1, 1], [], []>} : vector<2x16xf32>, vector<16x16xf32>, vector<2x16xf32> -> vector<2x16xf32>
    %c0_22 = arith.constant 0 : index
    %c0_23 = arith.constant 0 : index
    %36 = vector.load %arg6[%c0_22, %c0_23] : memref<1x16xf32, #tpu.memory_space<vmem>>, vector<1x16xf32>
    %37 = vector.broadcast %36 : vector<1x16xf32> to vector<2x16xf32>
    %38 = arith.addf %35, %37 : vector<2x16xf32>
    %c0_24 = arith.constant 0 : index
    %c0_25 = arith.constant 0 : index
    %39 = vector.load %arg7[%c0_24, %c0_25] : memref<1x16xf32, #tpu.memory_space<vmem>>, vector<1x16xf32>
    %c0_26 = arith.constant 0 : index
    %c0_27 = arith.constant 0 : index
    %40 = vector.load %arg8[%c0_26, %c0_27] : memref<1x16xf32, #tpu.memory_space<vmem>>, vector<1x16xf32>
    %cst_28 = arith.constant dense<0.000000e+00> : vector<16xf32>
    %41 = vector.multi_reduction <add>, %38, %cst_28 [0] : vector<2x16xf32> to vector<16xf32>
    %42 = vector.shape_cast %41 : vector<16xf32> to vector<1x16xf32>
    %cst_29 = arith.constant 2.000000e+00 : f32
    %43 = vector.broadcast %cst_29 : f32 to vector<1x16xf32>
    %44 = arith.divf %42, %43 : vector<1x16xf32>
    %45 = vector.broadcast %44 : vector<1x16xf32> to vector<2x16xf32>
    %46 = arith.subf %38, %45 : vector<2x16xf32>
    %47 = arith.mulf %46, %46 : vector<2x16xf32>
    %cst_30 = arith.constant dense<0.000000e+00> : vector<16xf32>
    %48 = vector.multi_reduction <add>, %47, %cst_30 [0] : vector<2x16xf32> to vector<16xf32>
    %49 = vector.shape_cast %48 : vector<16xf32> to vector<1x16xf32>
    %cst_31 = arith.constant 2.000000e+00 : f32
    %50 = vector.broadcast %cst_31 : f32 to vector<1x16xf32>
    %51 = arith.divf %49, %50 : vector<1x16xf32>
    %cst_32 = arith.constant 9.99999974E-6 : f32
    %52 = vector.broadcast %cst_32 : f32 to vector<1x16xf32>
    %53 = arith.addf %51, %52 : vector<1x16xf32>
    %54 = math.rsqrt %53 : vector<1x16xf32>
    %55 = vector.broadcast %54 : vector<1x16xf32> to vector<2x16xf32>
    %56 = arith.mulf %46, %55 : vector<2x16xf32>
    %57 = vector.broadcast %39 : vector<1x16xf32> to vector<2x16xf32>
    %58 = arith.mulf %56, %57 : vector<2x16xf32>
    %59 = vector.broadcast %40 : vector<1x16xf32> to vector<2x16xf32>
    %60 = arith.addf %58, %59 : vector<2x16xf32>
    %cst_33 = arith.constant 5.000000e-01 : f32
    %61 = vector.broadcast %cst_33 : f32 to vector<2x16xf32>
    %62 = arith.mulf %61, %60 : vector<2x16xf32>
    %63 = math.tanh %62 : vector<2x16xf32>
    %cst_34 = arith.constant 1.000000e+00 : f32
    %64 = vector.broadcast %cst_34 : f32 to vector<2x16xf32>
    %65 = arith.addf %63, %64 : vector<2x16xf32>
    %cst_35 = arith.constant 5.000000e-01 : f32
    %66 = vector.broadcast %cst_35 : f32 to vector<2x16xf32>
    %67 = arith.mulf %66, %65 : vector<2x16xf32>
    %cst_36 = arith.constant dense<0.000000e+00> : vector<2x16xf32>
    %68 = tpu.matmul %4, %5, %cst_36 {dimension_numbers = #tpu.dot_dimension_numbers<[1], [0], [0], [1], [0, 0, 1, 1], [], []>} : vector<2x16xf32>, vector<16x16xf32>, vector<2x16xf32> -> vector<2x16xf32>
    %c0_37 = arith.constant 0 : index
    %c0_38 = arith.constant 0 : index
    %69 = vector.load %arg2[%c0_37, %c0_38] : memref<1x16xf32, #tpu.memory_space<vmem>>, vector<1x16xf32>
    %70 = vector.broadcast %69 : vector<1x16xf32> to vector<2x16xf32>
    %71 = arith.addf %68, %70 : vector<2x16xf32>
    %c0_39 = arith.constant 0 : index
    %c0_40 = arith.constant 0 : index
    %72 = vector.load %arg3[%c0_39, %c0_40] : memref<1x16xf32, #tpu.memory_space<vmem>>, vector<1x16xf32>
    %c0_41 = arith.constant 0 : index
    %c0_42 = arith.constant 0 : index
    %73 = vector.load %arg4[%c0_41, %c0_42] : memref<1x16xf32, #tpu.memory_space<vmem>>, vector<1x16xf32>
    %cst_43 = arith.constant dense<0.000000e+00> : vector<16xf32>
    %74 = vector.multi_reduction <add>, %71, %cst_43 [0] : vector<2x16xf32> to vector<16xf32>
    %75 = vector.shape_cast %74 : vector<16xf32> to vector<1x16xf32>
    %cst_44 = arith.constant 2.000000e+00 : f32
    %76 = vector.broadcast %cst_44 : f32 to vector<1x16xf32>
    %77 = arith.divf %75, %76 : vector<1x16xf32>
    %78 = vector.broadcast %77 : vector<1x16xf32> to vector<2x16xf32>
    %79 = arith.subf %71, %78 : vector<2x16xf32>
    %80 = arith.mulf %79, %79 : vector<2x16xf32>
    %cst_45 = arith.constant dense<0.000000e+00> : vector<16xf32>
    %81 = vector.multi_reduction <add>, %80, %cst_45 [0] : vector<2x16xf32> to vector<16xf32>
    %82 = vector.shape_cast %81 : vector<16xf32> to vector<1x16xf32>
    %cst_46 = arith.constant 2.000000e+00 : f32
    %83 = vector.broadcast %cst_46 : f32 to vector<1x16xf32>
    %84 = arith.divf %82, %83 : vector<1x16xf32>
    %cst_47 = arith.constant 9.99999974E-6 : f32
    %85 = vector.broadcast %cst_47 : f32 to vector<1x16xf32>
    %86 = arith.addf %84, %85 : vector<1x16xf32>
    %87 = math.rsqrt %86 : vector<1x16xf32>
    %88 = vector.broadcast %87 : vector<1x16xf32> to vector<2x16xf32>
    %89 = arith.mulf %79, %88 : vector<2x16xf32>
    %90 = vector.broadcast %72 : vector<1x16xf32> to vector<2x16xf32>
    %91 = arith.mulf %89, %90 : vector<2x16xf32>
    %92 = vector.broadcast %73 : vector<1x16xf32> to vector<2x16xf32>
    %93 = arith.addf %91, %92 : vector<2x16xf32>
    %cst_48 = arith.constant 0.000000e+00 : f32
    %94 = vector.broadcast %cst_48 : f32 to vector<2x16xf32>
    %95 = arith.maximumf %93, %94 : vector<2x16xf32>
    %cst_49 = arith.constant dense<0.000000e+00> : vector<2x16xf32>
    %96 = tpu.matmul %95, %6, %cst_49 {dimension_numbers = #tpu.dot_dimension_numbers<[1], [0], [0], [1], [0, 0, 1, 1], [], []>} : vector<2x16xf32>, vector<16x16xf32>, vector<2x16xf32> -> vector<2x16xf32>
    %c0_50 = arith.constant 0 : index
    %c0_51 = arith.constant 0 : index
    %97 = vector.load %arg6[%c0_50, %c0_51] : memref<1x16xf32, #tpu.memory_space<vmem>>, vector<1x16xf32>
    %98 = vector.broadcast %97 : vector<1x16xf32> to vector<2x16xf32>
    %99 = arith.addf %96, %98 : vector<2x16xf32>
    %c0_52 = arith.constant 0 : index
    %c0_53 = arith.constant 0 : index
    %100 = vector.load %arg7[%c0_52, %c0_53] : memref<1x16xf32, #tpu.memory_space<vmem>>, vector<1x16xf32>
    %c0_54 = arith.constant 0 : index
    %c0_55 = arith.constant 0 : index
    %101 = vector.load %arg8[%c0_54, %c0_55] : memref<1x16xf32, #tpu.memory_space<vmem>>, vector<1x16xf32>
    %cst_56 = arith.constant dense<0.000000e+00> : vector<16xf32>
    %102 = vector.multi_reduction <add>, %99, %cst_56 [0] : vector<2x16xf32> to vector<16xf32>
    %103 = vector.shape_cast %102 : vector<16xf32> to vector<1x16xf32>
    %cst_57 = arith.constant 2.000000e+00 : f32
    %104 = vector.broadcast %cst_57 : f32 to vector<1x16xf32>
    %105 = arith.divf %103, %104 : vector<1x16xf32>
    %106 = vector.broadcast %105 : vector<1x16xf32> to vector<2x16xf32>
    %107 = arith.subf %99, %106 : vector<2x16xf32>
    %108 = arith.mulf %107, %107 : vector<2x16xf32>
    %cst_58 = arith.constant dense<0.000000e+00> : vector<16xf32>
    %109 = vector.multi_reduction <add>, %108, %cst_58 [0] : vector<2x16xf32> to vector<16xf32>
    %110 = vector.shape_cast %109 : vector<16xf32> to vector<1x16xf32>
    %cst_59 = arith.constant 2.000000e+00 : f32
    %111 = vector.broadcast %cst_59 : f32 to vector<1x16xf32>
    %112 = arith.divf %110, %111 : vector<1x16xf32>
    %cst_60 = arith.constant 9.99999974E-6 : f32
    %113 = vector.broadcast %cst_60 : f32 to vector<1x16xf32>
    %114 = arith.addf %112, %113 : vector<1x16xf32>
    %115 = math.rsqrt %114 : vector<1x16xf32>
    %116 = vector.broadcast %115 : vector<1x16xf32> to vector<2x16xf32>
    %117 = arith.mulf %107, %116 : vector<2x16xf32>
    %118 = vector.broadcast %100 : vector<1x16xf32> to vector<2x16xf32>
    %119 = arith.mulf %117, %118 : vector<2x16xf32>
    %120 = vector.broadcast %101 : vector<1x16xf32> to vector<2x16xf32>
    %121 = arith.addf %119, %120 : vector<2x16xf32>
    %cst_61 = arith.constant 5.000000e-01 : f32
    %122 = vector.broadcast %cst_61 : f32 to vector<2x16xf32>
    %123 = arith.mulf %122, %121 : vector<2x16xf32>
    %124 = math.tanh %123 : vector<2x16xf32>
    %cst_62 = arith.constant 1.000000e+00 : f32
    %125 = vector.broadcast %cst_62 : f32 to vector<2x16xf32>
    %126 = arith.addf %124, %125 : vector<2x16xf32>
    %cst_63 = arith.constant 5.000000e-01 : f32
    %127 = vector.broadcast %cst_63 : f32 to vector<2x16xf32>
    %128 = arith.mulf %127, %126 : vector<2x16xf32>
    %129 = arith.addf %67, %128 : vector<2x16xf32>
    %cst_64 = arith.constant 5.000000e-01 : f32
    %130 = vector.broadcast %cst_64 : f32 to vector<2x16xf32>
    %131 = arith.mulf %130, %129 : vector<2x16xf32>
    %132 = math.tanh %131 : vector<2x16xf32>
    %cst_65 = arith.constant 1.000000e+00 : f32
    %133 = vector.broadcast %cst_65 : f32 to vector<2x16xf32>
    %134 = arith.addf %132, %133 : vector<2x16xf32>
    %cst_66 = arith.constant 5.000000e-01 : f32
    %135 = vector.broadcast %cst_66 : f32 to vector<2x16xf32>
    %136 = arith.mulf %135, %134 : vector<2x16xf32>
    %cst_67 = arith.constant dense<0.000000e+00> : vector<2x128xf32>
    %137 = vector.multi_reduction <add>, %0, %cst_67 [1] : vector<2x16x128xf32> to vector<2x128xf32>
    %138 = vector.shape_cast %137 : vector<2x128xf32> to vector<2x1x128xf32>
    %cst_68 = arith.constant 1.600000e+01 : f32
    %139 = vector.broadcast %cst_68 : f32 to vector<2x1x128xf32>
    %140 = arith.divf %138, %139 : vector<2x1x128xf32>
    %cst_69 = arith.constant dense<0xFF800000> : vector<2x128xf32>
    %141 = vector.multi_reduction <maximumf>, %0, %cst_69 [1] : vector<2x16x128xf32> to vector<2x128xf32>
    %142 = vector.shape_cast %141 : vector<2x128xf32> to vector<2x1x128xf32>
    %c0_70 = arith.constant 0 : index
    %143 = memref.load %arg9[%c0_70] : memref<3xf32, #tpu.memory_space<smem>>
    %144 = vector.broadcast %143 : f32 to vector<2x1x128xf32>
    %145 = arith.mulf %144, %140 : vector<2x1x128xf32>
    %c1 = arith.constant 1 : index
    %146 = memref.load %arg9[%c1] : memref<3xf32, #tpu.memory_space<smem>>
    %147 = vector.broadcast %146 : f32 to vector<2x1x128xf32>
    %148 = arith.mulf %147, %142 : vector<2x1x128xf32>
    %149 = arith.addf %145, %148 : vector<2x1x128xf32>
    %c2 = arith.constant 2 : index
    %150 = memref.load %arg9[%c2] : memref<3xf32, #tpu.memory_space<smem>>
    %151 = vector.broadcast %150 : f32 to vector<2x1x128xf32>
    %152 = arith.addf %149, %151 : vector<2x1x128xf32>
    %cst_71 = arith.constant 5.000000e-01 : f32
    %153 = vector.broadcast %cst_71 : f32 to vector<2x1x128xf32>
    %154 = arith.mulf %153, %152 : vector<2x1x128xf32>
    %155 = math.tanh %154 : vector<2x1x128xf32>
    %cst_72 = arith.constant 1.000000e+00 : f32
    %156 = vector.broadcast %cst_72 : f32 to vector<2x1x128xf32>
    %157 = arith.addf %155, %156 : vector<2x1x128xf32>
    %cst_73 = arith.constant 5.000000e-01 : f32
    %158 = vector.broadcast %cst_73 : f32 to vector<2x1x128xf32>
    %159 = arith.mulf %158, %157 : vector<2x1x128xf32>
    %160 = vector.shape_cast %136 : vector<2x16xf32> to vector<2x16x1xf32>
    %161 = vector.broadcast %160 : vector<2x16x1xf32> to vector<2x16x128xf32>
    %162 = vector.broadcast %159 : vector<2x1x128xf32> to vector<2x16x128xf32>
    %163 = arith.mulf %161, %162 : vector<2x16x128xf32>
    %164 = arith.mulf %163, %0 : vector<2x16x128xf32>
    %c0_74 = arith.constant 0 : index
    %c0_75 = arith.constant 0 : index
    %c0_76 = arith.constant 0 : index
    %165 = vector.load %arg10[%c0_74, %c0_75, %c0_76] : memref<2x16x128xf32, #tpu.memory_space<vmem>>, vector<2x16x128xf32>
    tpu.vector_store %arg10[%c0_74, %c0_75, %c0_76], %164 {strides = array<i32>} : memref<2x16x128xf32, #tpu.memory_space<vmem>>, vector<2x16x128xf32>,
    return
  }
}

</mosaic_0001>

<llo_original>
// kernel: dam_forward.1
$region0: #{dam_forward.1}
  #allocation0 [shape = 'u32[]', space=smem, size = 0x4, offset = 0x4, fixed_abs, tag = 'smem constant byte address 0x4 - core index']
  #allocation1 [shape = 'u32[72,128]{1,0:T(1,128)}', space=vmem, size = 0x9000, scoped, tag = 'internal scratch']
  %s0 = inlined_call_operand.hbm [shape: f32[2,16,128], index: 0, kind: input, shape index: {}]
  %s1 = inlined_call_operand.hbm [shape: f32[16,16], index: 1, kind: input, shape index: {}]
  %s2 = inlined_call_operand.hbm [shape: f32[1,16], index: 2, kind: input, shape index: {}]
  %s3 = inlined_call_operand.vmem [shape: f32[1,16], index: 3, kind: input, shape index: {}]
  %s4 = inlined_call_operand.vmem [shape: f32[1,16], index: 4, kind: input, shape index: {}]
  %s5 = inlined_call_operand.hbm [shape: f32[16,16], index: 5, kind: input, shape index: {}]
  %s6 = inlined_call_operand.hbm [shape: f32[1,16], index: 6, kind: input, shape index: {}]
  %s7 = inlined_call_operand.vmem [shape: f32[1,16], index: 7, kind: input, shape index: {}]
  %s8 = inlined_call_operand.hbm [shape: f32[1,16], index: 8, kind: input, shape index: {}]
  %s9 = inlined_call_operand.vmem [shape: f32[3], index: 9, kind: input, shape index: {}]
  %s10 = inlined_call_operand.hbm [shape: f32[2,16,128], index: 10, kind: output, shape index: {}]
  %s11 = sld [smem:[#allocation0]]
  $region78: #{dam_forward.1} parent=0
    _
  %s13 = ssub.s32 1, %s11
  %s14 = scalar_select 0, %s13, %s11
  $region1: #{dam_forward.1} parent=0
    #allocation2 [shape = 'u8[16384]{0}', space=vmem, size = 0x4000, scoped, tag = 'input window, operand 0, single buffered']
    #allocation3 [shape = 's32[1]{0}', space=sflag, size = 0x4, scoped, tag = 'scoped memory for dam_forward.1']
    #allocation4 [shape = 's32[1]{0}', space=sflag, size = 0x4, scoped, tag = 'scoped memory for dam_forward.1']
    #allocation5 [shape = 's32[1]{0}', space=sflag, size = 0x4, scoped, tag = 'scoped memory for dam_forward.1']
    #allocation6 [shape = 'u8[8192]{0}', space=vmem, size = 0x2000, scoped, tag = 'input window, operand 1, single buffered']
    #allocation7 [shape = 's32[1]{0}', space=sflag, size = 0x4, scoped, tag = 'scoped memory for dam_forward.1']
    #allocation8 [shape = 'u8[512]{0}', space=vmem, size = 0x400, scoped, tag = 'input window, operand 2, single buffered']
    #allocation9 [shape = 'u8[8192]{0}', space=vmem, size = 0x2000, scoped, tag = 'input window, operand 5, single buffered']
    #allocation10 [shape = 's32[1]{0}', space=sflag, size = 0x4, scoped, tag = 'scoped memory for dam_forward.1']
    #allocation11 [shape = 'u8[512]{0}', space=vmem, size = 0x400, scoped, tag = 'input window, operand 6, single buffered']
    #allocation12 [shape = 'u8[512]{0}', space=vmem, size = 0x400, scoped, tag = 'input window, operand 8, single buffered']
    #allocation13 [shape = 's32[1]{0}', space=sflag, size = 0x4, scoped, tag = 'scoped memory for dam_forward.1']
    #allocation14 [shape = 'u8[512]{0}', space=smem, size = 0x200, scoped, tag = 'input window, operand 9, single buffered']
    #allocation15 [shape = 'u8[16384]{0}', space=vmem, size = 0x4000, scoped, tag = 'output window, operand 0, single buffered']
    %15 = vsyncpa [#allocation3], 0
    %16 = vsyncpa [#allocation7], 0
    %17 = vsyncpa [#allocation10], 0
    %18 = vsyncpa [#allocation13], 0
    %19 = vsyncpa [#allocation5], 0
    %20 = vsyncpa [#allocation4], 0
    // Predicated region
    $region2: #{dam_forward.1} parent=1 // pred_check
      _
    $region3: #{dam_forward.1} parent=1 // pred_check_branch
      %22 = sbr.rel (0) target = $region5
    $region4: #{dam_forward.1} parent=1 // pred_region
      %24 = vsyncadd [#allocation3], 0
      %s25 = sshll.u32 %s0, 4
      %s26 = int_to_ptr.hbm [resolvable:$true] %s25
      %s27 = sshll.u32 [#allocation2], 4
      %s28 = int_to_ptr.vmem [resolvable:$true] %s27
      %33 = dma.hbm_to_vmem [thread:$0]  %s26, 512, %s28, [#allocation3], 128, 128, 8
    $region5: #{dam_forward.1} parent=1 // pred_fallthru
      _
    // Predicated region
    $region6: #{dam_forward.1} parent=1 // pred_check
      _
    $region7: #{dam_forward.1} parent=1 // pred_check_branch
      %35 = sbr.rel (0) target = $region9
    $region8: #{dam_forward.1} parent=1 // pred_region
      %37 = vsyncadd [#allocation7], 0
      %s38 = sshll.u32 %s1, 4
      %s39 = int_to_ptr.hbm [resolvable:$true] %s38
      %s40 = sshll.u32 [#allocation6], 4
      %s41 = int_to_ptr.vmem [resolvable:$true] %s40
      %46 = dma.hbm_to_vmem [thread:$0]  %s39, 256, %s41, [#allocation7], 128, 128, 8
    $region9: #{dam_forward.1} parent=1 // pred_fallthru
      _
    // Predicated region
    $region10: #{dam_forward.1} parent=1 // pred_check
      _
    $region11: #{dam_forward.1} parent=1 // pred_check_branch
      %48 = sbr.rel (0) target = $region13
    $region12: #{dam_forward.1} parent=1 // pred_region
      %50 = vsyncadd [#allocation7], 0
      %s52 = sshll.u32 %s2, 4
      %s53 = int_to_ptr.hbm [resolvable:$true] %s52
      %s54 = sshll.u32 [#allocation8], 4
      %s55 = int_to_ptr.vmem [resolvable:$true] %s54
      %57 = dma.hbm_to_vmem [thread:$0]  %s53, 16, %s55, [#allocation7]
    $region13: #{dam_forward.1} parent=1 // pred_fallthru
      _
    // Predicated region
    $region14: #{dam_forward.1} parent=1 // pred_check
      _
    $region15: #{dam_forward.1} parent=1 // pred_check_branch
      %59 = sbr.rel (0) target = $region17
    $region16: #{dam_forward.1} parent=1 // pred_region
      _
    $region17: #{dam_forward.1} parent=1 // pred_fallthru
      _
    // Predicated region
    $region18: #{dam_forward.1} parent=1 // pred_check
      _
    $region19: #{dam_forward.1} parent=1 // pred_check_branch
      %61 = sbr.rel (0) target = $region21
    $region20: #{dam_forward.1} parent=1 // pred_region
      _
    $region21: #{dam_forward.1} parent=1 // pred_fallthru
      _
    // Predicated region
    $region22: #{dam_forward.1} parent=1 // pred_check
      _
    $region23: #{dam_forward.1} parent=1 // pred_check_branch
      %63 = sbr.rel (0) target = $region25
    $region24: #{dam_forward.1} parent=1 // pred_region
      %65 = vsyncadd [#allocation10], 0
      %s66 = sshll.u32 %s5, 4
      %s67 = int_to_ptr.hbm [resolvable:$true] %s66
      %s68 = sshll.u32 [#allocation9], 4
      %s69 = int_to_ptr.vmem [resolvable:$true] %s68
      %74 = dma.hbm_to_vmem [thread:$0]  %s67, 256, %s69, [#allocation10], 128, 128, 8
    $region25: #{dam_forward.1} parent=1 // pred_fallthru
      _
    // Predicated region
    $region26: #{dam_forward.1} parent=1 // pred_check
      _
    $region27: #{dam_forward.1} parent=1 // pred_check_branch
      %76 = sbr.rel (0) target = $region29
    $region28: #{dam_forward.1} parent=1 // pred_region
      %78 = vsyncadd [#allocation10], 0
      %s80 = sshll.u32 %s6, 4
      %s81 = int_to_ptr.hbm [resolvable:$true] %s80
      %s82 = sshll.u32 [#allocation11], 4
      %s83 = int_to_ptr.vmem [resolvable:$true] %s82
      %85 = dma.hbm_to_vmem [thread:$0]  %s81, 16, %s83, [#allocation10]
    $region29: #{dam_forward.1} parent=1 // pred_fallthru
      _
    // Predicated region
    $region30: #{dam_forward.1} parent=1 // pred_check
      _
    $region31: #{dam_forward.1} parent=1 // pred_check_branch
      %87 = sbr.rel (0) target = $region33
    $region32: #{dam_forward.1} parent=1 // pred_region
      _
    $region33: #{dam_forward.1} parent=1 // pred_fallthru
      _
    // Predicated region
    $region34: #{dam_forward.1} parent=1 // pred_check
      _
    $region35: #{dam_forward.1} parent=1 // pred_check_branch
      %89 = sbr.rel (0) target = $region37
    $region36: #{dam_forward.1} parent=1 // pred_region
      %91 = vsyncadd [#allocation13], 0
      %s93 = sshll.u32 %s8, 4
      %s94 = int_to_ptr.hbm [resolvable:$true] %s93
      %s95 = sshll.u32 [#allocation12], 4
      %s96 = int_to_ptr.vmem [resolvable:$true] %s95
      %98 = dma.hbm_to_vmem [thread:$0]  %s94, 16, %s96, [#allocation13]
    $region37: #{dam_forward.1} parent=1 // pred_fallthru
      _
    // Predicated region
    $region38: #{dam_forward.1} parent=1 // pred_check
      _
    $region39: #{dam_forward.1} parent=1 // pred_check_branch
      %100 = sbr.rel (0) target = $region41
    $region40: #{dam_forward.1} parent=1 // pred_region
      %102 = vsyncadd [#allocation5], 0
      %s104 = sshll.u32 %s9, 4
      %s105 = int_to_ptr.vmem [resolvable:$true] %s104
      %107 = dma.vmem_to_smem %s105, 16, [#allocation14], [#allocation5]
    $region41: #{dam_forward.1} parent=1 // pred_fallthru
      _
    // Predicated region
    $region42: #{dam_forward.1} parent=1 // pred_check
      _
    $region43: #{dam_forward.1} parent=1 // pred_check_branch
      %109 = sbr.rel (0) target = $region45
    $region44: #{dam_forward.1} parent=1 // pred_region
      %111 = dma.done [#allocation3], 512
    $region45: #{dam_forward.1} parent=1 // pred_fallthru
      _
    // Predicated region
    $region46: #{dam_forward.1} parent=1 // pred_check
      _
    $region47: #{dam_forward.1} parent=1 // pred_check_branch
      %113 = sbr.rel (0) target = $region49
    $region48: #{dam_forward.1} parent=1 // pred_region
      %115 = dma.done [#allocation7], 256
    $region49: #{dam_forward.1} parent=1 // pred_fallthru
      _
    // Predicated region
    $region50: #{dam_forward.1} parent=1 // pred_check
      _
    $region51: #{dam_forward.1} parent=1 // pred_check_branch
      %117 = sbr.rel (0) target = $region53
    $region52: #{dam_forward.1} parent=1 // pred_region
      %119 = dma.done [#allocation7], 16
    $region53: #{dam_forward.1} parent=1 // pred_fallthru
      _
    // Predicated region
    $region54: #{dam_forward.1} parent=1 // pred_check
      _
    $region55: #{dam_forward.1} parent=1 // pred_check_branch
      %121 = sbr.rel (0) target = $region57
    $region56: #{dam_forward.1} parent=1 // pred_region
      %123 = dma.done [#allocation10], 256
    $region57: #{dam_forward.1} parent=1 // pred_fallthru
      _
    // Predicated region
    $region58: #{dam_forward.1} parent=1 // pred_check
      _
    $region59: #{dam_forward.1} parent=1 // pred_check_branch
      %125 = sbr.rel (0) target = $region61
    $region60: #{dam_forward.1} parent=1 // pred_region
      %127 = dma.done [#allocation10], 16
    $region61: #{dam_forward.1} parent=1 // pred_fallthru
      _
    // Predicated region
    $region62: #{dam_forward.1} parent=1 // pred_check
      _
    $region63: #{dam_forward.1} parent=1 // pred_check_branch
      %129 = sbr.rel (0) target = $region65
    $region64: #{dam_forward.1} parent=1 // pred_region
      %131 = dma.done [#allocation13], 16
    $region65: #{dam_forward.1} parent=1 // pred_fallthru
      _
    // Predicated region
    $region66: #{dam_forward.1} parent=1 // pred_check
      _
    $region67: #{dam_forward.1} parent=1 // pred_check_branch
      %133 = sbr.rel (0) target = $region69
    $region68: #{dam_forward.1} parent=1 // pred_region
      %135 = dma.done [#allocation5], 16
    $region69: #{dam_forward.1} parent=1 // pred_fallthru
      _
    %136 = sfence
    %v137 = vld [vmem:[#allocation2] sm:$0xff]
    %v138 = vld [vmem:[#allocation2 + $0x8] sm:$0xff]
    %v139 = vld [vmem:[#allocation2 + $0x10] sm:$0xff]
    %v140 = vld [vmem:[#allocation2 + $0x18] sm:$0xff]
    %141 = vadd.xlane.f32.xlu0 %v137
    %v142 = vpop.xlane.xlu0 %141
    %143 = vadd.xlane.f32.xlu0 %v138
    %v144 = vpop.xlane.xlu0 %143
    %145 = vadd.xlane.f32.xlu0 %v139
    %v146 = vpop.xlane.xlu0 %145
    %147 = vadd.xlane.f32.xlu0 %v140
    %v148 = vpop.xlane.xlu0 %147
    %v149 = vrcp.pop 128.0
    %v150 = vmul.f32 128.0, %v149
    %v151 = vsub.f32 1.0, %v150
    %v152 = vmul.f32 %v149, %v151
    %v153 = vadd.f32 %v149, %v152
    %vm154 = vweird.f32 %v149
    %v155 = vsel %vm154, %v149, %v153
    %v156 = vmul.f32 %v142, %v155
    %v157 = vmul.f32 %v144, %v155
    %v158 = vmul.f32 %v146, %v155
    %v159 = vmul.f32 %v148, %v155
    %160 = vmax.xlane.f32.xlu0 %v137
    %v161 = vpop.xlane.xlu0 %160
    %162 = vmax.xlane.f32.xlu0 %v138
    %v163 = vpop.xlane.xlu0 %162
    %164 = vmax.xlane.f32.xlu0 %v139
    %v165 = vpop.xlane.xlu0 %164
    %166 = vmax.xlane.f32.xlu0 %v140
    %v167 = vpop.xlane.xlu0 %166
    %v168 = vld [vmem:[#allocation6] sm:$0xff]
    %v169 = vld [vmem:[#allocation6 + $0x8] sm:$0xff]
    %v170 = vld [vmem:[#allocation9] sm:$0xff]
    %v171 = vld [vmem:[#allocation9 + $0x8] sm:$0xff]
    %v172 = vld [vmem:[#allocation8] sm:$0x1]
    %v174 = vperm.slane %v172, 0
    %v180 = vlaneseq
    %v181 = vand.u32 %v180, 127
    %v182 = vperm.slane %v156, %v181
    %v183 = vadd.s32 %v181, 4294967288
    %v184 = vperm.slane %v157, %v183
    %vm185 = vcmask 130112
    %v186 = vsel %vm185, %v184, %v182
    %v187 = vperm.slane %v158, %v181
    %v188 = vperm.slane %v159, %v183
    %v189 = vsel %vm185, %v188, %v187
    %vm190 = vcmask 1041409
    %v191 = vsel %vm190, %v189, %v186
    %vm192 = vcmask 130048
    %v193 = vsel %vm192, %v191, 0
    %195 = vmatpush.msra.mxu0 0.0
    %196 = vmatpush.msra.mxu0 0.0
    %197 = vmatpush.msra.mxu0 0.0
    %198 = vmatpush.msra.mxu0 0.0
    %199 = vmatpush.msra.mxu0 0.0
    %200 = vmatpush.msra.mxu0 0.0
    %201 = vmatpush.msra.mxu0 0.0
    %202 = vmatpush.msra.mxu0 0.0
    %203 = vmatpush.msra.mxu0 0.0
    %204 = vmatpush.msra.mxu0 0.0
    %205 = vmatpush.msra.mxu0 0.0
    %206 = vmatpush.msra.mxu0 0.0
    %207 = vmatpush.msra.mxu0 0.0
    %208 = vmatpush.msra.mxu0 0.0
    %209 = vmatpush.msra.mxu0 %v169
    %210 = vmatpush.msra.mxu0 %v168
    %211 = vmatmul.f32.gmra.mxu0 %v193
    %v212 = vpop.f32.mrf.mxu0
    %v213 = vadd.f32 %v174, %v212
    %214 = vdwg.mxu0
    %v215 = vld [vmem:[%s3] sm:$0x1]
    %v216 = vld [vmem:[%s4] sm:$0x1]
    %vm217 = vcmask 123904
    %v218 = vsel %vm217, %v213, 0.0
    %v219 = vrot.slane %v218, 4
    %v220 = vadd.f32 %v218, %v219
    %v221 = vrot.slane %v220, 2
    %v222 = vadd.f32 %v220, %v221
    %v223 = vrot.slane %v222, 1
    %v224 = vadd.f32 %v222, %v223
    %v225 = vrcp.pop 2.0
    %v226 = vmul.f32 2.0, %v225
    %v227 = vsub.f32 1.0, %v226
    %v228 = vmul.f32 %v225, %v227
    %v229 = vadd.f32 %v225, %v228
    %vm230 = vweird.f32 %v225
    %v231 = vsel %vm230, %v225, %v229
    %v232 = vmul.f32 %v224, %v231
    %v233 = vsub.f32 %v213, %v232
    %v234 = vmul.f32 %v233, %v233
    %v235 = vsel %vm217, %v234, 0.0
    %v236 = vrot.slane %v235, 4
    %v237 = vadd.f32 %v235, %v236
    %v238 = vrot.slane %v237, 2
    %v239 = vadd.f32 %v237, %v238
    %v240 = vrot.slane %v239, 1
    %v241 = vadd.f32 %v239, %v240
    %v242 = vmul.f32 %v241, %v231
    %v243 = vadd.f32 %v242, 1e-05
    %v244 = vrsqrt.pop %v243
    %v245 = vmul.f32 %v244, %v243
    %v246 = vmul.f32 %v245, %v244
    %v247 = vmul.f32 0.5, %v246
    %v248 = vsub.f32 1.5, %v247
    %v249 = vmul.f32 %v244, %v248
    %vm250 = vweird.f32 %v243
    %vm251 = vweird.f32 %v244
    %vm252 = vmor %vm250, %vm251
    %v253 = vsel %vm252, %v244, %v249
    %v254 = vmul.f32 %v233, %v253
    %v256 = vperm.slane %v215, 0
    %v258 = vmul.f32 %v254, %v256
    %v260 = vperm.slane %v216, 0
    %v262 = vadd.f32 %v258, %v260
    %v263 = vmax.f32 %v262, 0.0
    %v264 = vld [vmem:[#allocation11] sm:$0x1]
    %v266 = vperm.slane %v264, 0
    %v269 = vsel %vm192, %v263, 0
    %271 = vmatpush.msra.mxu0 0.0
    %272 = vmatpush.msra.mxu0 0.0
    %273 = vmatpush.msra.mxu0 0.0
    %274 = vmatpush.msra.mxu0 0.0
    %275 = vmatpush.msra.mxu0 0.0
    %276 = vmatpush.msra.mxu0 0.0
    %277 = vmatpush.msra.mxu0 0.0
    %278 = vmatpush.msra.mxu0 0.0
    %279 = vmatpush.msra.mxu0 0.0
    %280 = vmatpush.msra.mxu0 0.0
    %281 = vmatpush.msra.mxu0 0.0
    %282 = vmatpush.msra.mxu0 0.0
    %283 = vmatpush.msra.mxu0 0.0
    %284 = vmatpush.msra.mxu0 0.0
    %285 = vmatpush.msra.mxu0 %v171
    %286 = vmatpush.msra.mxu0 %v170
    %287 = vmatmul.f32.gmra.mxu0 %v269
    %v288 = vpop.f32.mrf.mxu0
    %v289 = vadd.f32 %v266, %v288
    %290 = vdwg.mxu0
    %v291 = vld [vmem:[%s7] sm:$0x1]
    %v292 = vld [vmem:[#allocation12] sm:$0x1]
    %v293 = vsel %vm217, %v289, 0.0
    %v294 = vrot.slane %v293, 4
    %v295 = vadd.f32 %v293, %v294
    %v296 = vrot.slane %v295, 2
    %v297 = vadd.f32 %v295, %v296
    %v298 = vrot.slane %v297, 1
    %v299 = vadd.f32 %v297, %v298
    %v300 = vmul.f32 %v299, %v231
    %v301 = vsub.f32 %v289, %v300
    %v302 = vmul.f32 %v301, %v301
    %v303 = vsel %vm217, %v302, 0.0
    %v304 = vrot.slane %v303, 4
    %v305 = vadd.f32 %v303, %v304
    %v306 = vrot.slane %v305, 2
    %v307 = vadd.f32 %v305, %v306
    %v308 = vrot.slane %v307, 1
    %v309 = vadd.f32 %v307, %v308
    %v310 = vmul.f32 %v309, %v231
    %v311 = vadd.f32 %v310, 1e-05
    %v312 = vrsqrt.pop %v311
    %v313 = vmul.f32 %v312, %v311
    %v314 = vmul.f32 %v313, %v312
    %v315 = vmul.f32 0.5, %v314
    %v316 = vsub.f32 1.5, %v315
    %v317 = vmul.f32 %v312, %v316
    %vm318 = vweird.f32 %v311
    %vm319 = vweird.f32 %v312
    %vm320 = vmor %vm318, %vm319
    %v321 = vsel %vm320, %v312, %v317
    %v322 = vmul.f32 %v301, %v321
    %v324 = vperm.slane %v291, 0
    %v326 = vmul.f32 %v322, %v324
    %v328 = vperm.slane %v292, 0
    %v330 = vadd.f32 %v326, %v328
    %v331 = vmul.f32 %v330, 0.5
    %v332 = vtanh.pop %v331
    %v333 = vadd.f32 %v332, 1.0
    %v334 = vmul.f32 %v333, 0.5
    %v339 = vperm.slane %v161, %v181
    %v340 = vperm.slane %v163, %v183
    %v341 = vsel %vm185, %v340, %v339
    %v342 = vperm.slane %v165, %v181
    %v343 = vperm.slane %v167, %v183
    %v344 = vsel %vm185, %v343, %v342
    %v345 = vsel %vm190, %v344, %v341
    %v346 = vsel %vm192, %v345, 0
    %348 = vmatpush.msra.mxu0 0.0
    %349 = vmatpush.msra.mxu0 0.0
    %350 = vmatpush.msra.mxu0 0.0
    %351 = vmatpush.msra.mxu0 0.0
    %352 = vmatpush.msra.mxu0 0.0
    %353 = vmatpush.msra.mxu0 0.0
    %354 = vmatpush.msra.mxu0 0.0
    %355 = vmatpush.msra.mxu0 0.0
    %356 = vmatpush.msra.mxu0 0.0
    %357 = vmatpush.msra.mxu0 0.0
    %358 = vmatpush.msra.mxu0 0.0
    %359 = vmatpush.msra.mxu0 0.0
    %360 = vmatpush.msra.mxu0 0.0
    %361 = vmatpush.msra.mxu0 0.0
    %362 = vmatpush.msra.mxu0 %v169
    %363 = vmatpush.msra.mxu0 %v168
    %364 = vmatmul.f32.gmra.mxu0 %v346
    %v365 = vpop.f32.mrf.mxu0
    %v366 = vadd.f32 %v174, %v365
    %367 = vdwg.mxu0
    %v368 = vsel %vm217, %v366, 0.0
    %v369 = vrot.slane %v368, 4
    %v370 = vadd.f32 %v368, %v369
    %v371 = vrot.slane %v370, 2
    %v372 = vadd.f32 %v370, %v371
    %v373 = vrot.slane %v372, 1
    %v374 = vadd.f32 %v372, %v373
    %v375 = vmul.f32 %v374, %v231
    %v376 = vsub.f32 %v366, %v375
    %v377 = vmul.f32 %v376, %v376
    %v378 = vsel %vm217, %v377, 0.0
    %v379 = vrot.slane %v378, 4
    %v380 = vadd.f32 %v378, %v379
    %v381 = vrot.slane %v380, 2
    %v382 = vadd.f32 %v380, %v381
    %v383 = vrot.slane %v382, 1
    %v384 = vadd.f32 %v382, %v383
    %v385 = vmul.f32 %v384, %v231
    %v386 = vadd.f32 %v385, 1e-05
    %v387 = vrsqrt.pop %v386
    %v388 = vmul.f32 %v387, %v386
    %v389 = vmul.f32 %v388, %v387
    %v390 = vmul.f32 0.5, %v389
    %v391 = vsub.f32 1.5, %v390
    %v392 = vmul.f32 %v387, %v391
    %vm393 = vweird.f32 %v386
    %vm394 = vweird.f32 %v387
    %vm395 = vmor %vm393, %vm394
    %v396 = vsel %vm395, %v387, %v392
    %v397 = vmul.f32 %v376, %v396
    %v398 = vmul.f32 %v397, %v256
    %v399 = vadd.f32 %v398, %v260
    %v400 = vmax.f32 %v399, 0.0
    %v402 = vsel %vm192, %v400, 0
    %404 = vmatpush.msra.mxu0 0.0
    %405 = vmatpush.msra.mxu0 0.0
    %406 = vmatpush.msra.mxu0 0.0
    %407 = vmatpush.msra.mxu0 0.0
    %408 = vmatpush.msra.mxu0 0.0
    %409 = vmatpush.msra.mxu0 0.0
    %410 = vmatpush.msra.mxu0 0.0
    %411 = vmatpush.msra.mxu0 0.0
    %412 = vmatpush.msra.mxu0 0.0
    %413 = vmatpush.msra.mxu0 0.0
    %414 = vmatpush.msra.mxu0 0.0
    %415 = vmatpush.msra.mxu0 0.0
    %416 = vmatpush.msra.mxu0 0.0
    %417 = vmatpush.msra.mxu0 0.0
    %418 = vmatpush.msra.mxu0 %v171
    %419 = vmatpush.msra.mxu0 %v170
    %420 = vmatmul.f32.gmra.mxu0 %v402
    %v421 = vpop.f32.mrf.mxu0
    %v422 = vadd.f32 %v266, %v421
    %423 = vdwg.mxu0
    %v424 = vsel %vm217, %v422, 0.0
    %v425 = vrot.slane %v424, 4
    %v426 = vadd.f32 %v424, %v425
    %v427 = vrot.slane %v426, 2
    %v428 = vadd.f32 %v426, %v427
    %v429 = vrot.slane %v428, 1
    %v430 = vadd.f32 %v428, %v429
    %v431 = vmul.f32 %v430, %v231
    %v432 = vsub.f32 %v422, %v431
    %v433 = vmul.f32 %v432, %v432
    %v434 = vsel %vm217, %v433, 0.0
    %v435 = vrot.slane %v434, 4
    %v436 = vadd.f32 %v434, %v435
    %v437 = vrot.slane %v436, 2
    %v438 = vadd.f32 %v436, %v437
    %v439 = vrot.slane %v438, 1
    %v440 = vadd.f32 %v438, %v439
    %v441 = vmul.f32 %v440, %v231
    %v442 = vadd.f32 %v441, 1e-05
    %v443 = vrsqrt.pop %v442
    %v444 = vmul.f32 %v443, %v442
    %v445 = vmul.f32 %v444, %v443
    %v446 = vmul.f32 0.5, %v445
    %v447 = vsub.f32 1.5, %v446
    %v448 = vmul.f32 %v443, %v447
    %vm449 = vweird.f32 %v442
    %vm450 = vweird.f32 %v443
    %vm451 = vmor %vm449, %vm450
    %v452 = vsel %vm451, %v443, %v448
    %v453 = vmul.f32 %v432, %v452
    %v454 = vmul.f32 %v453, %v324
    %v455 = vadd.f32 %v454, %v328
    %v456 = vmul.f32 %v455, 0.5
    %v457 = vtanh.pop %v456
    %v458 = vadd.f32 %v457, 1.0
    %v459 = vmul.f32 %v458, 0.5
    %v460 = vadd.f32 %v334, %v459
    %v461 = vmul.f32 %v460, 0.5
    %v462 = vtanh.pop %v461
    %v463 = vadd.f32 %v462, 1.0
    %v464 = vmul.f32 %v463, 0.5
    %v465 = vadd.f32 %v137, %v138
    %v466 = vrot.slane %v465, 4
    %v467 = vadd.f32 %v465, %v466
    %v468 = vrot.slane %v467, 2
    %v469 = vadd.f32 %v467, %v468
    %v470 = vrot.slane %v469, 1
    %v471 = vadd.f32 %v469, %v470
    %v472 = vadd.f32 %v139, %v140
    %v473 = vrot.slane %v472, 4
    %v474 = vadd.f32 %v472, %v473
    %v475 = vrot.slane %v474, 2
    %v476 = vadd.f32 %v474, %v475
    %v477 = vrot.slane %v476, 1
    %v478 = vadd.f32 %v476, %v477
    %v479 = vrcp.pop 16.0
    %v480 = vmul.f32 16.0, %v479
    %v481 = vsub.f32 1.0, %v480
    %v482 = vmul.f32 %v479, %v481
    %v483 = vadd.f32 %v479, %v482
    %vm484 = vweird.f32 %v479
    %v485 = vsel %vm484, %v479, %v483
    %v486 = vmul.f32 %v471, %v485
    %v487 = vmul.f32 %v478, %v485
    %v488 = vmax.f32 %v137, %v138
    %v489 = vrot.slane %v488, 4
    %v490 = vmax.f32 %v488, %v489
    %v491 = vrot.slane %v490, 2
    %v492 = vmax.f32 %v490, %v491
    %v493 = vrot.slane %v492, 1
    %v494 = vmax.f32 %v492, %v493
    %v495 = vmax.f32 %v139, %v140
    %v496 = vrot.slane %v495, 4
    %v497 = vmax.f32 %v495, %v496
    %v498 = vrot.slane %v497, 2
    %v499 = vmax.f32 %v497, %v498
    %v500 = vrot.slane %v499, 1
    %v501 = vmax.f32 %v499, %v500
    %s502 = sld [smem:[#allocation14]]
    %v503 = vstv %s502
    %v504 = vmul.f32 %v503, %v486
    %v505 = vmul.f32 %v503, %v487
    %s506 = sld [smem:[#allocation14 + $0x1]]
    %v507 = vstv %s506
    %v508 = vmul.f32 %v507, %v494
    %v509 = vmul.f32 %v507, %v501
    %v510 = vadd.f32 %v504, %v508
    %v511 = vadd.f32 %v505, %v509
    %s512 = sld [smem:[#allocation14 + $0x2]]
    %v513 = vstv %s512
    %v514 = vadd.f32 %v510, %v513
    %v515 = vadd.f32 %v511, %v513
    %v516 = vmul.f32 %v514, 0.5
    %v517 = vmul.f32 %v515, 0.5
    %v518 = vtanh.pop %v516
    %v519 = vtanh.pop %v517
    %v520 = vadd.f32 %v518, 1.0
    %v521 = vadd.f32 %v519, 1.0
    %v522 = vmul.f32 %v520, 0.5
    %v523 = vmul.f32 %v521, 0.5
    %v524 = vperm.slane %v464, 0
    %v525 = vlaneseq
    %v526 = vshrl.u32 %v525, 7
    %528 = vset.pattern.permute.xlu0 %v526
    %529 = vperm.xlu0 %528, %v524
    %v530 = vpop.permute.xlu0 %529
    %v531 = vlaneseq
    %v532 = vshrl.u32 %v531, 7
    %v533 = vadd.s32 %v532, 8
    %534 = vset.pattern.permute.xlu0 %v533
    %535 = vperm.xlu0 %534, %v524
    %v536 = vpop.permute.xlu0 %535
    %v537 = vperm.slane %v464, 1
    %v538 = vlaneseq
    %v539 = vshrl.u32 %v538, 7
    %541 = vset.pattern.permute.xlu0 %v539
    %542 = vperm.xlu0 %541, %v537
    %v543 = vpop.permute.xlu0 %542
    %v544 = vlaneseq
    %v545 = vshrl.u32 %v544, 7
    %v546 = vadd.s32 %v545, 8
    %547 = vset.pattern.permute.xlu0 %v546
    %548 = vperm.xlu0 %547, %v537
    %v549 = vpop.permute.xlu0 %548
    %v550 = vmul.f32 %v530, %v522
    %v551 = vmul.f32 %v536, %v522
    %v552 = vmul.f32 %v543, %v523
    %v553 = vmul.f32 %v549, %v523
    %v554 = vmul.f32 %v550, %v137
    %v555 = vmul.f32 %v551, %v138
    %v556 = vmul.f32 %v552, %v139
    %v557 = vmul.f32 %v553, %v140
    %558 = vst [vmem:[#allocation15] sm:$0xff] %v554
    %559 = vst [vmem:[#allocation15 + $0x8] sm:$0xff] %v555
    %560 = vst [vmem:[#allocation15 + $0x10] sm:$0xff] %v556
    %561 = vst [vmem:[#allocation15 + $0x18] sm:$0xff] %v557
    // Predicated region
    $region70: #{dam_forward.1} parent=1 // pred_check
      _
    $region71: #{dam_forward.1} parent=1 // pred_check_branch
      %563 = sbr.rel (0) target = $region73
    $region72: #{dam_forward.1} parent=1 // pred_region
      %565 = vsyncadd [#allocation4], 0
      %s566 = sshll.u32 [#allocation15], 4
      %s567 = int_to_ptr.vmem [resolvable:$true] %s566
      %s568 = sshll.u32 %s10, 4
      %s569 = int_to_ptr.hbm [resolvable:$true] %s568
      %574 = dma.vmem_to_hbm [thread:$0]  %s567, 512, %s569, [#allocation4], 128, 128, 8
    $region73: #{dam_forward.1} parent=1 // pred_fallthru
      _
    // Predicated region
    $region74: #{dam_forward.1} parent=1 // pred_check
      _
    $region75: #{dam_forward.1} parent=1 // pred_check_branch
      %576 = sbr.rel (0) target = $region77
    $region76: #{dam_forward.1} parent=1 // pred_region
      %578 = dma.done [#allocation4], 512
    $region77: #{dam_forward.1} parent=1 // pred_fallthru
      _
    %579 = vsyncpa [#allocation3], 1
    %580 = vsyncpa [#allocation7], 1
    %581 = vsyncpa [#allocation10], 1
    %582 = vsyncpa [#allocation13], 1
    %583 = vsyncpa [#allocation4], 1
    %584 = vsyncpa [#allocation5], 1

</llo_original>
